<compile_context>
chip_gen: v7x
topology: tpu7x:2x2x1
jax: 0.10.0
libtpu: 0.0.40
codegen_flags: <defaults>
</compile_context>

<pallas_src>
import functools

import numpy as np
import jax
import jax.numpy as jnp
from jax.experimental import pallas as pl
from jax.experimental.pallas import tpu as pltpu

MIN_VAL = -100000.0
NEG_BIG = -3.0e38          # used only inside a select (never added to), safely < any score
START_TAG = '<START>'
END_TAG = '<END>'
LANE = 128                 # lane padding for the tag axis
SUB = 8                    # sublane padding for the tag axis (f32 tile height)
GROUP = 8                  # time steps per backpointer tile / inner unroll


def _round_up(x, m):
    return ((x + m - 1) // m) * m


def _viterbi_kernel(trans_t_ref, feats_ref, bp_ref, vfin_ref, vcol_ref,
                    *, start_idx, seq_len):
    """One chunk of the Viterbi forward recursion.

    trans_t_ref : [TS, TL]  trans_t[j, i] = trans[i, j]  (prev tag j on sublanes,
                                                          new tag i on lanes)
    feats_ref   : [C,  TL]  emission scores for this chunk, tag on lanes
    bp_ref      : [C,  TL]  int32 backpointers for this chunk
    vfin_ref    : [TS, 1]   final viterbi scores (prev-tag on sublanes), output
    vcol_ref    : [TS, 1]   running viterbi scores, persists across chunks (scratch)
    """
    TS, TL = trans_t_ref.shape
    C = feats_ref.shape[0]
    c = pl.program_id(0)

    sub_iota = jax.lax.broadcasted_iota(jnp.int32, (TS, TL), 0)    # prev-tag index j
    lane_iota = jax.lax.broadcasted_iota(jnp.int32, (TS, TL), 1)   # new-tag index i
    diag = lane_iota == sub_iota                                   # lane i <-> sublane i
    grp_sub = jax.lax.broadcasted_iota(jnp.int32, (GROUP, TL), 0)  # row-in-tile index

    @pl.when(c == 0)
    def _():
        init_sub = jax.lax.broadcasted_iota(jnp.int32, (TS, 1), 0)
        vcol_ref[...] = jnp.where(init_sub == start_idx, 0.0, MIN_VAL).astype(jnp.float32)

    trans_t = trans_t_ref[...]        # [TS, TL] — hoisted, loop invariant, one vreg
    base = c * C
    n_groups = C // GROUP

    def group(g, vcol):
        g0 = pl.multiple_of(g * GROUP, GROUP)
        bp_tile = jnp.zeros((GROUP, TL), jnp.int32)
        for u in range(GROUP):                                     # unrolled 8-step body
            t_local = g0 + u
            # scores[j, i] = trans[i, j] + vprob[j]
            scores = trans_t + vcol                                            # [TS, TL]
            maxes_row = jnp.max(scores, axis=0, keepdims=True)                 # [1,  TL]
            arg_row = jnp.min(jnp.where(scores == maxes_row, sub_iota, TS),
                              axis=0, keepdims=True).astype(jnp.int32)         # [1,  TL]
            feat_row = feats_ref[pl.ds(t_local, 1), :]                         # [1,  TL]
            vrow_new = maxes_row + feat_row                                    # [1,  TL]
            # Exact lane-indexed -> sublane-indexed relayout: for sublane i keep only
            # lane i and reduce over lanes.
            vcol_new = jnp.max(jnp.where(diag,
                                         jnp.broadcast_to(vrow_new, (TS, TL)),
                                         NEG_BIG),
                               axis=1, keepdims=True)                          # [TS, 1]
            valid = (base + t_local) < seq_len      # freeze carry on padded timesteps
            vcol = jnp.where(valid, vcol_new, vcol)
            bp_tile = jnp.where(grp_sub == u,
                                jnp.broadcast_to(arg_row, (GROUP, TL)),
                                bp_tile)
        bp_ref[pl.ds(g0, GROUP), :] = bp_tile       # one aligned full-tile store / 8 steps
        return vcol

    vcol_fin = jax.lax.fori_loop(0, n_groups, group, vcol_ref[...])
    vcol_ref[...] = vcol_fin
    vfin_ref[...] = vcol_fin


def crf_viterbi_pallas(feats, trans, start_idx, end_idx):
    """Equivalent of CRF.viterbi(feats, sent_len) -> (final_score, best_seq)."""
    S, num_tags = feats.shape
    TS = max(SUB, _round_up(num_tags, SUB))      # sublane padding of the tag axis
    TL = max(LANE, _round_up(num_tags, LANE))    # lane padding of the tag axis

    S8 = _round_up(max(S, 1), GROUP)
    chunk = S8 if S8 <= 512 else 512             # timesteps per grid step
    S_pad = _round_up(S8, chunk)
    n_chunks = S_pad // chunk

    trans_f32 = trans.astype(jnp.float32)
    # Padded rows/cols get MIN_VAL so padded tags can never win a max/argmax.
    trans_t_p = jnp.full((TS, TL), MIN_VAL, jnp.float32)
    trans_t_p = trans_t_p.at[:num_tags, :num_tags].set(trans_f32.T)

    feats_p = jnp.zeros((S_pad, TL), jnp.float32)
    feats_p = feats_p.at[:S, :num_tags].set(feats.astype(jnp.float32))

    kernel = functools.partial(_viterbi_kernel, start_idx=start_idx, seq_len=S)

    backptrs, vfin = pl.pallas_call(
        kernel,
        out_shape=(jax.ShapeDtypeStruct((S_pad, TL), jnp.int32),   # backpointers
                   jax.ShapeDtypeStruct((TS, 1), jnp.float32)),    # final vprobs (column)
        grid=(n_chunks,),
        in_specs=[pl.BlockSpec((TS, TL), lambda c: (0, 0)),
                  pl.BlockSpec((chunk, TL), lambda c: (c, 0))],
        out_specs=(pl.BlockSpec((chunk, TL), lambda c: (c, 0)),
                   pl.BlockSpec((TS, 1), lambda c: (0, 0))),
        scratch_shapes=[pltpu.VMEM((TS, 1), jnp.float32)],
        compiler_params=pltpu.CompilerParams(dimension_semantics=("arbitrary",)),
    )(trans_t_p, feats_p)

    # ---- glue: final temp_probs / argmax + backpointer chase (scalar work) ----
    vprob_final = vfin[:num_tags, 0]
    temp = trans_f32[end_idx, :num_tags] + vprob_final      # == temp_probs in torch
    final_tag = jnp.argmax(temp).astype(jnp.int32)
    final_score = temp[final_tag]

    def back_step(tag, bp_row):
        return bp_row[tag], tag

    _, rev_tags = jax.lax.scan(back_step, final_tag, backptrs[:S][::-1])
    tag_seq = rev_tags[::-1]            # == best_seq[1:] in the torch code
    return final_score, tag_seq


def crf_forward(sentence, feats, trans, tag_to_ix):
    """Mirrors CRF.forward: sentence is only used for its length (unused by viterbi)."""
    del sentence
    return crf_viterbi_pallas(feats, trans, tag_to_ix[START_TAG], tag_to_ix[END_TAG])


def _numpy_reference_viterbi(feats_np, trans_np, start_idx, end_idx):
    """Direct replication of the PyTorch viterbi semantics (for verification)."""
    T = trans_np.shape[0]
    vprobs = np.full((T,), MIN_VAL, np.float32)
    vprobs[start_idx] = 0.0
    backptrs = []
    for feat in feats_np:
        scores = trans_np + vprobs[None, :]
        backptrs.append(scores.argmax(axis=1))
        vprobs = scores.max(axis=1) + feat
    temp = trans_np[end_idx] + vprobs
    final_tag = int(temp.argmax())
    final_score = float(temp[final_tag])
    best = [final_tag]
    for bp in reversed(backptrs):
        best.append(int(bp[best[-1]]))
    best.reverse()
    return final_score, best[1:]


if __name__ == "__main__":
    tag_to_ix = {'O': 0, 'B': 1, 'I': 2, 'E': 3, 'S': 4, START_TAG: 5, END_TAG: 6}
    num_tags = len(tag_to_ix)
    seq_len = 8

    key = jax.random.PRNGKey(0)
    k_trans, k_feats, k_sent = jax.random.split(key, 3)

    # Deterministic parameter init (same structure as CRF.__init__):
    # small random transitions, then START row / END column forced to MIN_VAL.
    trans = 0.1 * jax.random.normal(k_trans, (num_tags, num_tags), jnp.float32)
    trans = trans.at[tag_to_ix[START_TAG], :].set(MIN_VAL)
    trans = trans.at[:, tag_to_ix[END_TAG]].set(MIN_VAL)

    feats = jax.random.normal(k_feats, (seq_len, num_tags), jnp.float32)
    sentence = jax.random.randint(k_sent, (seq_len,), 0, 100)

    score, tag_seq = crf_forward(sentence, feats, trans, tag_to_ix)
    score = jax.block_until_ready(score)
    tag_seq = jax.block_until_ready(tag_seq)

    ref_score, ref_seq = _numpy_reference_viterbi(
        np.asarray(feats, np.float32), np.asarray(trans, np.float32),
        tag_to_ix[START_TAG], tag_to_ix[END_TAG])

    np.testing.assert_allclose(float(score), ref_score, rtol=1e-5, atol=1e-5)
    assert list(np.asarray(tag_seq)) == ref_seq, (list(np.asarray(tag_seq)), ref_seq)

    print("KERNEL_OK")
</pallas_src>

<mosaic_0001>
module attributes {stable_mosaic.version = 11 : i64} {
  func.func @_viterbi_kernel(%arg0: i32, %arg1: memref<8x128xf32, #tpu.memory_space<vmem>>, %arg2: memref<8x128xf32, #tpu.memory_space<vmem>>, %arg3: memref<8x128xi32, #tpu.memory_space<vmem>>, %arg4: memref<8x1xf32, #tpu.memory_space<vmem>>, %arg5: memref<8x1xf32, #tpu.memory_space<vmem>>) attributes {dimension_semantics = [#tpu.dimension_semantics<arbitrary>], iteration_bounds = array<i64: 1>, scalar_prefetch = 0 : i64, scratch_operands = 1 : i64, tpu.core_type = #tpu.core_type<tc>, window_params = [{pipeline_mode = #tpu.pipeline_mode<synchronous>, transform_indices = @transform_0, window_bounds = array<i64: 8, 128>}, {transform_indices = @transform_1, window_bounds = array<i64: 8, 128>}, {transform_indices = @transform_2, window_bounds = array<i64: 8, 128>}, {pipeline_mode = #tpu.pipeline_mode<synchronous>, transform_indices = @transform_3, window_bounds = array<i64: 8, 1>}]} {
    %0 = tpu.iota {dimensions = array<i32: 0>} : vector<8x128xi32>
    %1 = tpu.iota {dimensions = array<i32: 1>} : vector<8x128xi32>
    %2 = arith.cmpi eq, %1, %0 : vector<8x128xi32>
    %3 = tpu.iota {dimensions = array<i32: 0>} : vector<8x128xi32>
    %c0_i32 = arith.constant 0 : i32
    %4 = arith.cmpi eq, %arg0, %c0_i32 : i32
    %5 = arith.extui %4 : i1 to i32
    %c0_i32_0 = arith.constant 0 : i32
    %6 = arith.cmpi ne, %5, %c0_i32_0 : i32
    scf.if %6 {
      %241 = tpu.iota {dimensions = array<i32: 0>} : vector<8x1xi32>
      %c5_i32_77 = arith.constant 5 : i32
      %242 = vector.broadcast %c5_i32_77 : i32 to vector<8x1xi32>
      %243 = arith.cmpi eq, %241, %242 : vector<8x1xi32>
      %cst_78 = arith.constant 0.000000e+00 : f32
      %cst_79 = arith.constant -1.000000e+05 : f32
      %244 = vector.broadcast %cst_78 : f32 to vector<8x1xf32>
      %245 = vector.broadcast %cst_79 : f32 to vector<8x1xf32>
      %246 = arith.select %243, %244, %245 : vector<8x1xi1>, vector<8x1xf32>
      %c0_80 = arith.constant 0 : index
      %c0_81 = arith.constant 0 : index
      %247 = vector.load %arg5[%c0_80, %c0_81] : memref<8x1xf32, #tpu.memory_space<vmem>>, vector<8x1xf32>
      tpu.vector_store %arg5[%c0_80, %c0_81], %246 {strides = array<i32>} : memref<8x1xf32, #tpu.memory_space<vmem>>, vector<8x1xf32>,
    } else {
    }
    %c0 = arith.constant 0 : index
    %c0_1 = arith.constant 0 : index
    %7 = vector.load %arg1[%c0, %c0_1] : memref<8x128xf32, #tpu.memory_space<vmem>>, vector<8x128xf32>
    %c8_i32 = arith.constant 8 : i32
    %8 = arith.muli %arg0, %c8_i32 : i32
    %c0_2 = arith.constant 0 : index
    %c0_3 = arith.constant 0 : index
    %9 = vector.load %arg5[%c0_2, %c0_3] : memref<8x1xf32, #tpu.memory_space<vmem>>, vector<8x1xf32>
    %c0_i32_4 = arith.constant 0 : i32
    %c8_i32_5 = arith.constant 8 : i32
    %10 = arith.muli %c0_i32_4, %c8_i32_5 : i32
    %11 = tpu.assume_multiple %10, 8 : i32
    %c0_i32_6 = arith.constant 0 : i32
    %12 = vector.broadcast %c0_i32_6 : i32 to vector<8x128xi32>
    %c0_i32_7 = arith.constant 0 : i32
    %13 = arith.addi %11, %c0_i32_7 : i32
    %14 = vector.broadcast %9 : vector<8x1xf32> to vector<8x128xf32>
    %15 = arith.addf %7, %14 : vector<8x128xf32>
    %cst = arith.constant dense<0xFF800000> : vector<128xf32>
    %16 = vector.multi_reduction <maximumf>, %15, %cst [0] : vector<8x128xf32> to vector<128xf32>
    %17 = vector.shape_cast %16 : vector<128xf32> to vector<1x128xf32>
    %18 = vector.broadcast %17 : vector<1x128xf32> to vector<8x128xf32>
    %19 = arith.cmpf oeq, %15, %18 : vector<8x128xf32>
    %c8_i32_8 = arith.constant 8 : i32
    %20 = vector.broadcast %c8_i32_8 : i32 to vector<8x128xi32>
    %21 = arith.select %19, %0, %20 : vector<8x128xi1>, vector<8x128xi32>
    %cst_9 = arith.constant dense<2147483647> : vector<128xi32>
    %22 = vector.multi_reduction <minsi>, %21, %cst_9 [0] : vector<8x128xi32> to vector<128xi32>
    %23 = vector.shape_cast %22 : vector<128xi32> to vector<1x128xi32>
    %24 = arith.index_cast %13 : i32 to index
    %c0_10 = arith.constant 0 : index
    %25 = vector.load %arg2[%24, %c0_10] : memref<8x128xf32, #tpu.memory_space<vmem>>, vector<1x128xf32>
    %26 = arith.addf %17, %25 : vector<1x128xf32>
    %27 = vector.shape_cast %26 : vector<1x128xf32> to vector<1x128xf32>
    %28 = vector.broadcast %27 : vector<1x128xf32> to vector<8x128xf32>
    %cst_11 = arith.constant -3.000000e+38 : f32
    %29 = vector.broadcast %cst_11 : f32 to vector<8x128xf32>
    %30 = arith.select %2, %28, %29 : vector<8x128xi1>, vector<8x128xf32>
    %cst_12 = arith.constant dense<0xFF800000> : vector<8xf32>
    %31 = vector.multi_reduction <maximumf>, %30, %cst_12 [1] : vector<8x128xf32> to vector<8xf32>
    %32 = vector.shape_cast %31 : vector<8xf32> to vector<8x1xf32>
    %33 = arith.addi %8, %13 : i32
    %c8_i32_13 = arith.constant 8 : i32
    %34 = arith.cmpi slt, %33, %c8_i32_13 : i32
    %35 = arith.select %34, %32, %9 : vector<8x1xf32>
    %c0_i32_14 = arith.constant 0 : i32
    %36 = vector.broadcast %c0_i32_14 : i32 to vector<8x128xi32>
    %37 = arith.cmpi eq, %3, %36 : vector<8x128xi32>
    %38 = vector.shape_cast %23 : vector<1x128xi32> to vector<1x128xi32>
    %39 = vector.broadcast %38 : vector<1x128xi32> to vector<8x128xi32>
    %40 = arith.select %37, %39, %12 : vector<8x128xi1>, vector<8x128xi32>
    %c1_i32 = arith.constant 1 : i32
    %41 = arith.addi %11, %c1_i32 : i32
    %42 = vector.broadcast %35 : vector<8x1xf32> to vector<8x128xf32>
    %43 = arith.addf %7, %42 : vector<8x128xf32>
    %cst_15 = arith.constant dense<0xFF800000> : vector<128xf32>
    %44 = vector.multi_reduction <maximumf>, %43, %cst_15 [0] : vector<8x128xf32> to vector<128xf32>
    %45 = vector.shape_cast %44 : vector<128xf32> to vector<1x128xf32>
    %46 = vector.broadcast %45 : vector<1x128xf32> to vector<8x128xf32>
    %47 = arith.cmpf oeq, %43, %46 : vector<8x128xf32>
    %c8_i32_16 = arith.constant 8 : i32
    %48 = vector.broadcast %c8_i32_16 : i32 to vector<8x128xi32>
    %49 = arith.select %47, %0, %48 : vector<8x128xi1>, vector<8x128xi32>
    %cst_17 = arith.constant dense<2147483647> : vector<128xi32>
    %50 = vector.multi_reduction <minsi>, %49, %cst_17 [0] : vector<8x128xi32> to vector<128xi32>
    %51 = vector.shape_cast %50 : vector<128xi32> to vector<1x128xi32>
    %52 = arith.index_cast %41 : i32 to index
    %c0_18 = arith.constant 0 : index
    %53 = vector.load %arg2[%52, %c0_18] : memref<8x128xf32, #tpu.memory_space<vmem>>, vector<1x128xf32>
    %54 = arith.addf %45, %53 : vector<1x128xf32>
    %55 = vector.shape_cast %54 : vector<1x128xf32> to vector<1x128xf32>
    %56 = vector.broadcast %55 : vector<1x128xf32> to vector<8x128xf32>
    %cst_19 = arith.constant -3.000000e+38 : f32
    %57 = vector.broadcast %cst_19 : f32 to vector<8x128xf32>
    %58 = arith.select %2, %56, %57 : vector<8x128xi1>, vector<8x128xf32>
    %cst_20 = arith.constant dense<0xFF800000> : vector<8xf32>
    %59 = vector.multi_reduction <maximumf>, %58, %cst_20 [1] : vector<8x128xf32> to vector<8xf32>
    %60 = vector.shape_cast %59 : vector<8xf32> to vector<8x1xf32>
    %61 = arith.addi %8, %41 : i32
    %c8_i32_21 = arith.constant 8 : i32
    %62 = arith.cmpi slt, %61, %c8_i32_21 : i32
    %63 = arith.select %62, %60, %35 : vector<8x1xf32>
    %c1_i32_22 = arith.constant 1 : i32
    %64 = vector.broadcast %c1_i32_22 : i32 to vector<8x128xi32>
    %65 = arith.cmpi eq, %3, %64 : vector<8x128xi32>
    %66 = vector.shape_cast %51 : vector<1x128xi32> to vector<1x128xi32>
    %67 = vector.broadcast %66 : vector<1x128xi32> to vector<8x128xi32>
    %68 = arith.select %65, %67, %40 : vector<8x128xi1>, vector<8x128xi32>
    %c2_i32 = arith.constant 2 : i32
    %69 = arith.addi %11, %c2_i32 : i32
    %70 = vector.broadcast %63 : vector<8x1xf32> to vector<8x128xf32>
    %71 = arith.addf %7, %70 : vector<8x128xf32>
    %cst_23 = arith.constant dense<0xFF800000> : vector<128xf32>
    %72 = vector.multi_reduction <maximumf>, %71, %cst_23 [0] : vector<8x128xf32> to vector<128xf32>
    %73 = vector.shape_cast %72 : vector<128xf32> to vector<1x128xf32>
    %74 = vector.broadcast %73 : vector<1x128xf32> to vector<8x128xf32>
    %75 = arith.cmpf oeq, %71, %74 : vector<8x128xf32>
    %c8_i32_24 = arith.constant 8 : i32
    %76 = vector.broadcast %c8_i32_24 : i32 to vector<8x128xi32>
    %77 = arith.select %75, %0, %76 : vector<8x128xi1>, vector<8x128xi32>
    %cst_25 = arith.constant dense<2147483647> : vector<128xi32>
    %78 = vector.multi_reduction <minsi>, %77, %cst_25 [0] : vector<8x128xi32> to vector<128xi32>
    %79 = vector.shape_cast %78 : vector<128xi32> to vector<1x128xi32>
    %80 = arith.index_cast %69 : i32 to index
    %c0_26 = arith.constant 0 : index
    %81 = vector.load %arg2[%80, %c0_26] : memref<8x128xf32, #tpu.memory_space<vmem>>, vector<1x128xf32>
    %82 = arith.addf %73, %81 : vector<1x128xf32>
    %83 = vector.shape_cast %82 : vector<1x128xf32> to vector<1x128xf32>
    %84 = vector.broadcast %83 : vector<1x128xf32> to vector<8x128xf32>
    %cst_27 = arith.constant -3.000000e+38 : f32
    %85 = vector.broadcast %cst_27 : f32 to vector<8x128xf32>
    %86 = arith.select %2, %84, %85 : vector<8x128xi1>, vector<8x128xf32>
    %cst_28 = arith.constant dense<0xFF800000> : vector<8xf32>
    %87 = vector.multi_reduction <maximumf>, %86, %cst_28 [1] : vector<8x128xf32> to vector<8xf32>
    %88 = vector.shape_cast %87 : vector<8xf32> to vector<8x1xf32>
    %89 = arith.addi %8, %69 : i32
    %c8_i32_29 = arith.constant 8 : i32
    %90 = arith.cmpi slt, %89, %c8_i32_29 : i32
    %91 = arith.select %90, %88, %63 : vector<8x1xf32>
    %c2_i32_30 = arith.constant 2 : i32
    %92 = vector.broadcast %c2_i32_30 : i32 to vector<8x128xi32>
    %93 = arith.cmpi eq, %3, %92 : vector<8x128xi32>
    %94 = vector.shape_cast %79 : vector<1x128xi32> to vector<1x128xi32>
    %95 = vector.broadcast %94 : vector<1x128xi32> to vector<8x128xi32>
    %96 = arith.select %93, %95, %68 : vector<8x128xi1>, vector<8x128xi32>
    %c3_i32 = arith.constant 3 : i32
    %97 = arith.addi %11, %c3_i32 : i32
    %98 = vector.broadcast %91 : vector<8x1xf32> to vector<8x128xf32>
    %99 = arith.addf %7, %98 : vector<8x128xf32>
    %cst_31 = arith.constant dense<0xFF800000> : vector<128xf32>
    %100 = vector.multi_reduction <maximumf>, %99, %cst_31 [0] : vector<8x128xf32> to vector<128xf32>
    %101 = vector.shape_cast %100 : vector<128xf32> to vector<1x128xf32>
    %102 = vector.broadcast %101 : vector<1x128xf32> to vector<8x128xf32>
    %103 = arith.cmpf oeq, %99, %102 : vector<8x128xf32>
    %c8_i32_32 = arith.constant 8 : i32
    %104 = vector.broadcast %c8_i32_32 : i32 to vector<8x128xi32>
    %105 = arith.select %103, %0, %104 : vector<8x128xi1>, vector<8x128xi32>
    %cst_33 = arith.constant dense<2147483647> : vector<128xi32>
    %106 = vector.multi_reduction <minsi>, %105, %cst_33 [0] : vector<8x128xi32> to vector<128xi32>
    %107 = vector.shape_cast %106 : vector<128xi32> to vector<1x128xi32>
    %108 = arith.index_cast %97 : i32 to index
    %c0_34 = arith.constant 0 : index
    %109 = vector.load %arg2[%108, %c0_34] : memref<8x128xf32, #tpu.memory_space<vmem>>, vector<1x128xf32>
    %110 = arith.addf %101, %109 : vector<1x128xf32>
    %111 = vector.shape_cast %110 : vector<1x128xf32> to vector<1x128xf32>
    %112 = vector.broadcast %111 : vector<1x128xf32> to vector<8x128xf32>
    %cst_35 = arith.constant -3.000000e+38 : f32
    %113 = vector.broadcast %cst_35 : f32 to vector<8x128xf32>
    %114 = arith.select %2, %112, %113 : vector<8x128xi1>, vector<8x128xf32>
    %cst_36 = arith.constant dense<0xFF800000> : vector<8xf32>
    %115 = vector.multi_reduction <maximumf>, %114, %cst_36 [1] : vector<8x128xf32> to vector<8xf32>
    %116 = vector.shape_cast %115 : vector<8xf32> to vector<8x1xf32>
    %117 = arith.addi %8, %97 : i32
    %c8_i32_37 = arith.constant 8 : i32
    %118 = arith.cmpi slt, %117, %c8_i32_37 : i32
    %119 = arith.select %118, %116, %91 : vector<8x1xf32>
    %c3_i32_38 = arith.constant 3 : i32
    %120 = vector.broadcast %c3_i32_38 : i32 to vector<8x128xi32>
    %121 = arith.cmpi eq, %3, %120 : vector<8x128xi32>
    %122 = vector.shape_cast %107 : vector<1x128xi32> to vector<1x128xi32>
    %123 = vector.broadcast %122 : vector<1x128xi32> to vector<8x128xi32>
    %124 = arith.select %121, %123, %96 : vector<8x128xi1>, vector<8x128xi32>
    %c4_i32 = arith.constant 4 : i32
    %125 = arith.addi %11, %c4_i32 : i32
    %126 = vector.broadcast %119 : vector<8x1xf32> to vector<8x128xf32>
    %127 = arith.addf %7, %126 : vector<8x128xf32>
    %cst_39 = arith.constant dense<0xFF800000> : vector<128xf32>
    %128 = vector.multi_reduction <maximumf>, %127, %cst_39 [0] : vector<8x128xf32> to vector<128xf32>
    %129 = vector.shape_cast %128 : vector<128xf32> to vector<1x128xf32>
    %130 = vector.broadcast %129 : vector<1x128xf32> to vector<8x128xf32>
    %131 = arith.cmpf oeq, %127, %130 : vector<8x128xf32>
    %c8_i32_40 = arith.constant 8 : i32
    %132 = vector.broadcast %c8_i32_40 : i32 to vector<8x128xi32>
    %133 = arith.select %131, %0, %132 : vector<8x128xi1>, vector<8x128xi32>
    %cst_41 = arith.constant dense<2147483647> : vector<128xi32>
    %134 = vector.multi_reduction <minsi>, %133, %cst_41 [0] : vector<8x128xi32> to vector<128xi32>
    %135 = vector.shape_cast %134 : vector<128xi32> to vector<1x128xi32>
    %136 = arith.index_cast %125 : i32 to index
    %c0_42 = arith.constant 0 : index
    %137 = vector.load %arg2[%136, %c0_42] : memref<8x128xf32, #tpu.memory_space<vmem>>, vector<1x128xf32>
    %138 = arith.addf %129, %137 : vector<1x128xf32>
    %139 = vector.shape_cast %138 : vector<1x128xf32> to vector<1x128xf32>
    %140 = vector.broadcast %139 : vector<1x128xf32> to vector<8x128xf32>
    %cst_43 = arith.constant -3.000000e+38 : f32
    %141 = vector.broadcast %cst_43 : f32 to vector<8x128xf32>
    %142 = arith.select %2, %140, %141 : vector<8x128xi1>, vector<8x128xf32>
    %cst_44 = arith.constant dense<0xFF800000> : vector<8xf32>
    %143 = vector.multi_reduction <maximumf>, %142, %cst_44 [1] : vector<8x128xf32> to vector<8xf32>
    %144 = vector.shape_cast %143 : vector<8xf32> to vector<8x1xf32>
    %145 = arith.addi %8, %125 : i32
    %c8_i32_45 = arith.constant 8 : i32
    %146 = arith.cmpi slt, %145, %c8_i32_45 : i32
    %147 = arith.select %146, %144, %119 : vector<8x1xf32>
    %c4_i32_46 = arith.constant 4 : i32
    %148 = vector.broadcast %c4_i32_46 : i32 to vector<8x128xi32>
    %149 = arith.cmpi eq, %3, %148 : vector<8x128xi32>
    %150 = vector.shape_cast %135 : vector<1x128xi32> to vector<1x128xi32>
    %151 = vector.broadcast %150 : vector<1x128xi32> to vector<8x128xi32>
    %152 = arith.select %149, %151, %124 : vector<8x128xi1>, vector<8x128xi32>
    %c5_i32 = arith.constant 5 : i32
    %153 = arith.addi %11, %c5_i32 : i32
    %154 = vector.broadcast %147 : vector<8x1xf32> to vector<8x128xf32>
    %155 = arith.addf %7, %154 : vector<8x128xf32>
    %cst_47 = arith.constant dense<0xFF800000> : vector<128xf32>
    %156 = vector.multi_reduction <maximumf>, %155, %cst_47 [0] : vector<8x128xf32> to vector<128xf32>
    %157 = vector.shape_cast %156 : vector<128xf32> to vector<1x128xf32>
    %158 = vector.broadcast %157 : vector<1x128xf32> to vector<8x128xf32>
    %159 = arith.cmpf oeq, %155, %158 : vector<8x128xf32>
    %c8_i32_48 = arith.constant 8 : i32
    %160 = vector.broadcast %c8_i32_48 : i32 to vector<8x128xi32>
    %161 = arith.select %159, %0, %160 : vector<8x128xi1>, vector<8x128xi32>
    %cst_49 = arith.constant dense<2147483647> : vector<128xi32>
    %162 = vector.multi_reduction <minsi>, %161, %cst_49 [0] : vector<8x128xi32> to vector<128xi32>
    %163 = vector.shape_cast %162 : vector<128xi32> to vector<1x128xi32>
    %164 = arith.index_cast %153 : i32 to index
    %c0_50 = arith.constant 0 : index
    %165 = vector.load %arg2[%164, %c0_50] : memref<8x128xf32, #tpu.memory_space<vmem>>, vector<1x128xf32>
    %166 = arith.addf %157, %165 : vector<1x128xf32>
    %167 = vector.shape_cast %166 : vector<1x128xf32> to vector<1x128xf32>
    %168 = vector.broadcast %167 : vector<1x128xf32> to vector<8x128xf32>
    %cst_51 = arith.constant -3.000000e+38 : f32
    %169 = vector.broadcast %cst_51 : f32 to vector<8x128xf32>
    %170 = arith.select %2, %168, %169 : vector<8x128xi1>, vector<8x128xf32>
    %cst_52 = arith.constant dense<0xFF800000> : vector<8xf32>
    %171 = vector.multi_reduction <maximumf>, %170, %cst_52 [1] : vector<8x128xf32> to vector<8xf32>
    %172 = vector.shape_cast %171 : vector<8xf32> to vector<8x1xf32>
    %173 = arith.addi %8, %153 : i32
    %c8_i32_53 = arith.constant 8 : i32
    %174 = arith.cmpi slt, %173, %c8_i32_53 : i32
    %175 = arith.select %174, %172, %147 : vector<8x1xf32>
    %c5_i32_54 = arith.constant 5 : i32
    %176 = vector.broadcast %c5_i32_54 : i32 to vector<8x128xi32>
    %177 = arith.cmpi eq, %3, %176 : vector<8x128xi32>
    %178 = vector.shape_cast %163 : vector<1x128xi32> to vector<1x128xi32>
    %179 = vector.broadcast %178 : vector<1x128xi32> to vector<8x128xi32>
    %180 = arith.select %177, %179, %152 : vector<8x128xi1>, vector<8x128xi32>
    %c6_i32 = arith.constant 6 : i32
    %181 = arith.addi %11, %c6_i32 : i32
    %182 = vector.broadcast %175 : vector<8x1xf32> to vector<8x128xf32>
    %183 = arith.addf %7, %182 : vector<8x128xf32>
    %cst_55 = arith.constant dense<0xFF800000> : vector<128xf32>
    %184 = vector.multi_reduction <maximumf>, %183, %cst_55 [0] : vector<8x128xf32> to vector<128xf32>
    %185 = vector.shape_cast %184 : vector<128xf32> to vector<1x128xf32>
    %186 = vector.broadcast %185 : vector<1x128xf32> to vector<8x128xf32>
    %187 = arith.cmpf oeq, %183, %186 : vector<8x128xf32>
    %c8_i32_56 = arith.constant 8 : i32
    %188 = vector.broadcast %c8_i32_56 : i32 to vector<8x128xi32>
    %189 = arith.select %187, %0, %188 : vector<8x128xi1>, vector<8x128xi32>
    %cst_57 = arith.constant dense<2147483647> : vector<128xi32>
    %190 = vector.multi_reduction <minsi>, %189, %cst_57 [0] : vector<8x128xi32> to vector<128xi32>
    %191 = vector.shape_cast %190 : vector<128xi32> to vector<1x128xi32>
    %192 = arith.index_cast %181 : i32 to index
    %c0_58 = arith.constant 0 : index
    %193 = vector.load %arg2[%192, %c0_58] : memref<8x128xf32, #tpu.memory_space<vmem>>, vector<1x128xf32>
    %194 = arith.addf %185, %193 : vector<1x128xf32>
    %195 = vector.shape_cast %194 : vector<1x128xf32> to vector<1x128xf32>
    %196 = vector.broadcast %195 : vector<1x128xf32> to vector<8x128xf32>
    %cst_59 = arith.constant -3.000000e+38 : f32
    %197 = vector.broadcast %cst_59 : f32 to vector<8x128xf32>
    %198 = arith.select %2, %196, %197 : vector<8x128xi1>, vector<8x128xf32>
    %cst_60 = arith.constant dense<0xFF800000> : vector<8xf32>
    %199 = vector.multi_reduction <maximumf>, %198, %cst_60 [1] : vector<8x128xf32> to vector<8xf32>
    %200 = vector.shape_cast %199 : vector<8xf32> to vector<8x1xf32>
    %201 = arith.addi %8, %181 : i32
    %c8_i32_61 = arith.constant 8 : i32
    %202 = arith.cmpi slt, %201, %c8_i32_61 : i32
    %203 = arith.select %202, %200, %175 : vector<8x1xf32>
    %c6_i32_62 = arith.constant 6 : i32
    %204 = vector.broadcast %c6_i32_62 : i32 to vector<8x128xi32>
    %205 = arith.cmpi eq, %3, %204 : vector<8x128xi32>
    %206 = vector.shape_cast %191 : vector<1x128xi32> to vector<1x128xi32>
    %207 = vector.broadcast %206 : vector<1x128xi32> to vector<8x128xi32>
    %208 = arith.select %205, %207, %180 : vector<8x128xi1>, vector<8x128xi32>
    %c7_i32 = arith.constant 7 : i32
    %209 = arith.addi %11, %c7_i32 : i32
    %210 = vector.broadcast %203 : vector<8x1xf32> to vector<8x128xf32>
    %211 = arith.addf %7, %210 : vector<8x128xf32>
    %cst_63 = arith.constant dense<0xFF800000> : vector<128xf32>
    %212 = vector.multi_reduction <maximumf>, %211, %cst_63 [0] : vector<8x128xf32> to vector<128xf32>
    %213 = vector.shape_cast %212 : vector<128xf32> to vector<1x128xf32>
    %214 = vector.broadcast %213 : vector<1x128xf32> to vector<8x128xf32>
    %215 = arith.cmpf oeq, %211, %214 : vector<8x128xf32>
    %c8_i32_64 = arith.constant 8 : i32
    %216 = vector.broadcast %c8_i32_64 : i32 to vector<8x128xi32>
    %217 = arith.select %215, %0, %216 : vector<8x128xi1>, vector<8x128xi32>
    %cst_65 = arith.constant dense<2147483647> : vector<128xi32>
    %218 = vector.multi_reduction <minsi>, %217, %cst_65 [0] : vector<8x128xi32> to vector<128xi32>
    %219 = vector.shape_cast %218 : vector<128xi32> to vector<1x128xi32>
    %220 = arith.index_cast %209 : i32 to index
    %c0_66 = arith.constant 0 : index
    %221 = vector.load %arg2[%220, %c0_66] : memref<8x128xf32, #tpu.memory_space<vmem>>, vector<1x128xf32>
    %222 = arith.addf %213, %221 : vector<1x128xf32>
    %223 = vector.shape_cast %222 : vector<1x128xf32> to vector<1x128xf32>
    %224 = vector.broadcast %223 : vector<1x128xf32> to vector<8x128xf32>
    %cst_67 = arith.constant -3.000000e+38 : f32
    %225 = vector.broadcast %cst_67 : f32 to vector<8x128xf32>
    %226 = arith.select %2, %224, %225 : vector<8x128xi1>, vector<8x128xf32>
    %cst_68 = arith.constant dense<0xFF800000> : vector<8xf32>
    %227 = vector.multi_reduction <maximumf>, %226, %cst_68 [1] : vector<8x128xf32> to vector<8xf32>
    %228 = vector.shape_cast %227 : vector<8xf32> to vector<8x1xf32>
    %229 = arith.addi %8, %209 : i32
    %c8_i32_69 = arith.constant 8 : i32
    %230 = arith.cmpi slt, %229, %c8_i32_69 : i32
    %231 = arith.select %230, %228, %203 : vector<8x1xf32>
    %c7_i32_70 = arith.constant 7 : i32
    %232 = vector.broadcast %c7_i32_70 : i32 to vector<8x128xi32>
    %233 = arith.cmpi eq, %3, %232 : vector<8x128xi32>
    %234 = vector.shape_cast %219 : vector<1x128xi32> to vector<1x128xi32>
    %235 = vector.broadcast %234 : vector<1x128xi32> to vector<8x128xi32>
    %236 = arith.select %233, %235, %208 : vector<8x128xi1>, vector<8x128xi32>
    %237 = arith.index_cast %11 : i32 to index
    %c0_71 = arith.constant 0 : index
    %238 = vector.load %arg3[%237, %c0_71] : memref<8x128xi32, #tpu.memory_space<vmem>>, vector<8x128xi32>
    tpu.vector_store %arg3[%237, %c0_71], %236 {strides = array<i32>} : memref<8x128xi32, #tpu.memory_space<vmem>>, vector<8x128xi32>,
    %c1_i32_72 = arith.constant 1 : i32
    %c0_73 = arith.constant 0 : index
    %c0_74 = arith.constant 0 : index
    %239 = vector.load %arg5[%c0_73, %c0_74] : memref<8x1xf32, #tpu.memory_space<vmem>>, vector<8x1xf32>
    tpu.vector_store %arg5[%c0_73, %c0_74], %231 {strides = array<i32>} : memref<8x1xf32, #tpu.memory_space<vmem>>, vector<8x1xf32>,
    %c0_75 = arith.constant 0 : index
    %c0_76 = arith.constant 0 : index
    %240 = vector.load %arg4[%c0_75, %c0_76] : memref<8x1xf32, #tpu.memory_space<vmem>>, vector<8x1xf32>
    tpu.vector_store %arg4[%c0_75, %c0_76], %231 {strides = array<i32>} : memref<8x1xf32, #tpu.memory_space<vmem>>, vector<8x1xf32>,
    return
  }
  func.func @transform_0(%arg0: i32) -> (i32, i32) {
    %c0_i32 = arith.constant 0 : i32
    %c0_i32_0 = arith.constant 0 : i32
    %c0_i32_1 = arith.constant 0 : i32
    return %c0_i32, %c0_i32_0 : i32, i32
  }
  func.func @transform_1(%arg0: i32) -> (i32, i32) {
    %c0_i32 = arith.constant 0 : i32
    %c0_i32_0 = arith.constant 0 : i32
    return %arg0, %c0_i32 : i32, i32
  }
  func.func @transform_2(%arg0: i32) -> (i32, i32) {
    %c0_i32 = arith.constant 0 : i32
    %c0_i32_0 = arith.constant 0 : i32
    return %arg0, %c0_i32 : i32, i32
  }
  func.func @transform_3(%arg0: i32) -> (i32, i32) {
    %c0_i32 = arith.constant 0 : i32
    %c0_i32_0 = arith.constant 0 : i32
    %c0_i32_1 = arith.constant 0 : i32
    return %c0_i32, %c0_i32_0 : i32, i32
  }
}

</mosaic_0001>

<llo_original>
// kernel: tpu_custom_call.1
$region0: #{tpu_custom_call.1}
  #allocation0 [shape = 'u32[]', space=smem, size = 0x4, offset = 0x4, fixed_abs, tag = 'smem constant byte address 0x4 - core index']
  #allocation1 [shape = 'u32[144,128]{1,0:T(1,128)}', space=vmem, size = 0x12000, scoped, tag = 'internal scratch']
  #allocation2 [shape = 'f32[8,1]{1,0:T(8,128)}', space=vmem, size = 0x1000, scoped, tag = 'scratch operand']
  %s0 = inlined_call_operand.hbm [shape: f32[8,128], index: 0, kind: input, shape index: {}]
  %s1 = inlined_call_operand.hbm [shape: f32[8,128], index: 1, kind: input, shape index: {}]
  %s2 = inlined_call_operand.hbm [shape: s32[8,128], index: 2, kind: output, shape index: {0}]
  %s3 = inlined_call_operand.vmem [shape: f32[8,1], index: 3, kind: output, shape index: {1}]
  %4 = xla_tuple %s2, %s3
  %s5 = sld [smem:[#allocation0]]
  $region38: #{tpu_custom_call.1} parent=0
    _
  %s7 = ssub.s32 1, %s5
  %s8 = scalar_select 0, %s7, %s5
  $region1: #{tpu_custom_call.1} parent=0
    #allocation3 [shape = 'u8[4096]{0}', space=vmem, size = 0x1000, scoped, tag = 'input window, operand 0, single buffered']
    #allocation4 [shape = 's32[1]{0}', space=sflag, size = 0x4, scoped, tag = 'scoped memory for tpu_custom_call.1']
    #allocation5 [shape = 's32[1]{0}', space=sflag, size = 0x4, scoped, tag = 'scoped memory for tpu_custom_call.1']
    #allocation6 [shape = 'u8[4096]{0}', space=vmem, size = 0x1000, scoped, tag = 'input window, operand 1, single buffered']
    #allocation7 [shape = 's32[1]{0}', space=sflag, size = 0x4, scoped, tag = 'scoped memory for tpu_custom_call.1']
    #allocation8 [shape = 'u8[4096]{0}', space=vmem, size = 0x1000, scoped, tag = 'output window, operand 0, single buffered']
    %9 = vsyncpa [#allocation4], 0
    %10 = vsyncpa [#allocation7], 0
    %11 = vsyncpa [#allocation5], 0
    // Predicated region
    $region2: #{tpu_custom_call.1} parent=1 // pred_check
      _
    $region3: #{tpu_custom_call.1} parent=1 // pred_check_branch
      %13 = sbr.rel (0) target = $region5
    $region4: #{tpu_custom_call.1} parent=1 // pred_region
      %s15 = ssub.s32 128, 128
      %16 = vsyncadd [#allocation4], %s15
      %s18 = sshll.u32 [#allocation3], 4
      %s19 = int_to_ptr.vmem [resolvable:$true] %s18
      %21 = dma.hbm_to_vmem [thread:$0]  %s0, 128, %s19, [#allocation4]
    $region5: #{tpu_custom_call.1} parent=1 // pred_fallthru
      _
    // Predicated region
    $region6: #{tpu_custom_call.1} parent=1 // pred_check
      _
    $region7: #{tpu_custom_call.1} parent=1 // pred_check_branch
      %23 = sbr.rel (0) target = $region9
    $region8: #{tpu_custom_call.1} parent=1 // pred_region
      %s25 = ssub.s32 128, 128
      %26 = vsyncadd [#allocation7], %s25
      %s28 = sshll.u32 [#allocation6], 4
      %s29 = int_to_ptr.vmem [resolvable:$true] %s28
      %31 = dma.hbm_to_vmem [thread:$0]  %s1, 128, %s29, [#allocation7]
    $region9: #{tpu_custom_call.1} parent=1 // pred_fallthru
      _
    // Predicated region
    $region10: #{tpu_custom_call.1} parent=1 // pred_check
      _
    $region11: #{tpu_custom_call.1} parent=1 // pred_check_branch
      %33 = sbr.rel (0) target = $region13
    $region12: #{tpu_custom_call.1} parent=1 // pred_region
      %34 = dma.done [#allocation4], 128
    $region13: #{tpu_custom_call.1} parent=1 // pred_fallthru
      _
    // Predicated region
    $region14: #{tpu_custom_call.1} parent=1 // pred_check
      _
    $region15: #{tpu_custom_call.1} parent=1 // pred_check_branch
      %36 = sbr.rel (0) target = $region17
    $region16: #{tpu_custom_call.1} parent=1 // pred_region
      %37 = dma.done [#allocation7], 128
    $region17: #{tpu_custom_call.1} parent=1 // pred_fallthru
      _
    %v38 = vlaneseq
    %v39 = vshrl.u32 %v38, 7
    %v40 = vlaneseq
    %v41 = vand.u32 %v40, 127
    %vm42 = vcmp.eq.s32.totalorder %v41, %v39
    %p43 = scmp.eq.s32.totalorder 0, 0
    // Predicated region
    $region18: #{tpu_custom_call.1} parent=1 // pred_check
      %p44 = pneg %p43
    $region19: #{tpu_custom_call.1} parent=1 // pred_check_branch
      %46 = sbr.rel (%p44) target = $region21
    $region20: #{tpu_custom_call.1} parent=1 // pred_region
      %vm47 = vcmp.eq.s32.totalorder %v39, 5
      %v48 = vsel %vm47, 0.0, -100000.0
      %vm49 = vcmask 7168
      %50 = vst.msk [vmem:[#allocation2] sm:$0xff] %vm49, %v48
    $region21: #{tpu_custom_call.1} parent=1 // pred_fallthru
      _
    %v51 = vld [vmem:[#allocation3] sm:$0xff]
    %s52 = smul.u32 0, 8
    %v53 = vld [vmem:[#allocation2] sm:$0xff]
    %55 = vset.pattern.permute.xlu0 0
    %56 = vperm.xlu0 %55, %v53
    %v57 = vpop.permute.xlu0 %56
    %v59 = vadd.f32 %v51, %v57
    %v60 = vrot.slane %v59, 4
    %v61 = vmax.f32 %v59, %v60
    %v62 = vrot.slane %v61, 2
    %v63 = vmax.f32 %v61, %v62
    %v64 = vrot.slane %v63, 1
    %v65 = vmax.f32 %v63, %v64
    %vm66 = vcmp.eq.f32.partialorder %v59, %v65
    %v67 = vsel %vm66, %v39, 8
    %v68 = vrot.slane %v67, 4
    %vm69 = vcmp.lt.s32.totalorder %v67, %v68
    %v70 = vsel %vm69, %v67, %v68
    %v71 = vrot.slane %v70, 2
    %vm72 = vcmp.lt.s32.totalorder %v70, %v71
    %v73 = vsel %vm72, %v70, %v71
    %v74 = vrot.slane %v73, 1
    %vm75 = vcmp.lt.s32.totalorder %v73, %v74
    %v76 = vsel %vm75, %v73, %v74
    %v77 = vld [vmem:[#allocation6] sm:$0x1]
    %v78 = vadd.f32 %v65, %v77
    %v79 = vlaneseq
    %v80 = vshrl.u32 %v79, 7
    %v81 = vsub.s32 0, %v80
    %v82 = vrot.slane %v78, %v81
    %v83 = vsel %vm42, %v82, -3e+38
    %84 = vmax.xlane.f32.xlu0 %v83
    %v85 = vpop.xlane.xlu0 %84
    %s86 = sadd.s32 %s52, 0
    %p87 = scmp.lt.s32.totalorder %s86, 8
    %s88 = scalar_select %p87, 1, 0
    %v89 = vstv %s88
    %vm90 = vcmp.eq.s32.totalorder %v89, 1
    %v91 = vsel %vm90, %v85, %v53
    %vm92 = vcmp.eq.s32.totalorder %v39, 0
    %v93 = vsel %vm92, %v76, 0
    %s94 = sadd.s32 0, 1
    %96 = vset.pattern.permute.xlu0 0
    %97 = vperm.xlu0 %96, %v91
    %v98 = vpop.permute.xlu0 %97
    %v100 = vadd.f32 %v51, %v98
    %v101 = vrot.slane %v100, 4
    %v102 = vmax.f32 %v100, %v101
    %v103 = vrot.slane %v102, 2
    %v104 = vmax.f32 %v102, %v103
    %v105 = vrot.slane %v104, 1
    %v106 = vmax.f32 %v104, %v105
    %vm107 = vcmp.eq.f32.partialorder %v100, %v106
    %v108 = vsel %vm107, %v39, 8
    %v109 = vrot.slane %v108, 4
    %vm110 = vcmp.lt.s32.totalorder %v108, %v109
    %v111 = vsel %vm110, %v108, %v109
    %v112 = vrot.slane %v111, 2
    %vm113 = vcmp.lt.s32.totalorder %v111, %v112
    %v114 = vsel %vm113, %v111, %v112
    %v115 = vrot.slane %v114, 1
    %vm116 = vcmp.lt.s32.totalorder %v114, %v115
    %v117 = vsel %vm116, %v114, %v115
    %s118 = scalar_lea.vmem [#allocation6], %s94
    %v119 = vld [vmem:[%s118] sm:$0x1]
    %v120 = vadd.f32 %v106, %v119
    %v121 = vlaneseq
    %v122 = vshrl.u32 %v121, 7
    %v123 = vsub.s32 0, %v122
    %v124 = vrot.slane %v120, %v123
    %v125 = vsel %vm42, %v124, -3e+38
    %126 = vmax.xlane.f32.xlu0 %v125
    %v127 = vpop.xlane.xlu0 %126
    %s128 = sadd.s32 %s52, %s94
    %p129 = scmp.lt.s32.totalorder %s128, 8
    %s130 = scalar_select %p129, 1, 0
    %v131 = vstv %s130
    %vm132 = vcmp.eq.s32.totalorder %v131, 1
    %v133 = vsel %vm132, %v127, %v91
    %vm134 = vcmp.eq.s32.totalorder %v39, 1
    %v135 = vsel %vm134, %v117, %v93
    %s136 = sadd.s32 0, 2
    %138 = vset.pattern.permute.xlu0 0
    %139 = vperm.xlu0 %138, %v133
    %v140 = vpop.permute.xlu0 %139
    %v142 = vadd.f32 %v51, %v140
    %v143 = vrot.slane %v142, 4
    %v144 = vmax.f32 %v142, %v143
    %v145 = vrot.slane %v144, 2
    %v146 = vmax.f32 %v144, %v145
    %v147 = vrot.slane %v146, 1
    %v148 = vmax.f32 %v146, %v147
    %vm149 = vcmp.eq.f32.partialorder %v142, %v148
    %v150 = vsel %vm149, %v39, 8
    %v151 = vrot.slane %v150, 4
    %vm152 = vcmp.lt.s32.totalorder %v150, %v151
    %v153 = vsel %vm152, %v150, %v151
    %v154 = vrot.slane %v153, 2
    %vm155 = vcmp.lt.s32.totalorder %v153, %v154
    %v156 = vsel %vm155, %v153, %v154
    %v157 = vrot.slane %v156, 1
    %vm158 = vcmp.lt.s32.totalorder %v156, %v157
    %v159 = vsel %vm158, %v156, %v157
    %s160 = scalar_lea.vmem [#allocation6], %s136
    %v161 = vld [vmem:[%s160] sm:$0x1]
    %v162 = vadd.f32 %v148, %v161
    %v163 = vlaneseq
    %v164 = vshrl.u32 %v163, 7
    %v165 = vsub.s32 0, %v164
    %v166 = vrot.slane %v162, %v165
    %v167 = vsel %vm42, %v166, -3e+38
    %168 = vmax.xlane.f32.xlu0 %v167
    %v169 = vpop.xlane.xlu0 %168
    %s170 = sadd.s32 %s52, %s136
    %p171 = scmp.lt.s32.totalorder %s170, 8
    %s172 = scalar_select %p171, 1, 0
    %v173 = vstv %s172
    %vm174 = vcmp.eq.s32.totalorder %v173, 1
    %v175 = vsel %vm174, %v169, %v133
    %vm176 = vcmp.eq.s32.totalorder %v39, 2
    %v177 = vsel %vm176, %v159, %v135
    %s178 = sadd.s32 0, 3
    %180 = vset.pattern.permute.xlu0 0
    %181 = vperm.xlu0 %180, %v175
    %v182 = vpop.permute.xlu0 %181
    %v184 = vadd.f32 %v51, %v182
    %v185 = vrot.slane %v184, 4
    %v186 = vmax.f32 %v184, %v185
    %v187 = vrot.slane %v186, 2
    %v188 = vmax.f32 %v186, %v187
    %v189 = vrot.slane %v188, 1
    %v190 = vmax.f32 %v188, %v189
    %vm191 = vcmp.eq.f32.partialorder %v184, %v190
    %v192 = vsel %vm191, %v39, 8
    %v193 = vrot.slane %v192, 4
    %vm194 = vcmp.lt.s32.totalorder %v192, %v193
    %v195 = vsel %vm194, %v192, %v193
    %v196 = vrot.slane %v195, 2
    %vm197 = vcmp.lt.s32.totalorder %v195, %v196
    %v198 = vsel %vm197, %v195, %v196
    %v199 = vrot.slane %v198, 1
    %vm200 = vcmp.lt.s32.totalorder %v198, %v199
    %v201 = vsel %vm200, %v198, %v199
    %s202 = scalar_lea.vmem [#allocation6], %s178
    %v203 = vld [vmem:[%s202] sm:$0x1]
    %v204 = vadd.f32 %v190, %v203
    %v205 = vlaneseq
    %v206 = vshrl.u32 %v205, 7
    %v207 = vsub.s32 0, %v206
    %v208 = vrot.slane %v204, %v207
    %v209 = vsel %vm42, %v208, -3e+38
    %210 = vmax.xlane.f32.xlu0 %v209
    %v211 = vpop.xlane.xlu0 %210
    %s212 = sadd.s32 %s52, %s178
    %p213 = scmp.lt.s32.totalorder %s212, 8
    %s214 = scalar_select %p213, 1, 0
    %v215 = vstv %s214
    %vm216 = vcmp.eq.s32.totalorder %v215, 1
    %v217 = vsel %vm216, %v211, %v175
    %vm218 = vcmp.eq.s32.totalorder %v39, 3
    %v219 = vsel %vm218, %v201, %v177
    %s220 = sadd.s32 0, 4
    %222 = vset.pattern.permute.xlu0 0
    %223 = vperm.xlu0 %222, %v217
    %v224 = vpop.permute.xlu0 %223
    %v226 = vadd.f32 %v51, %v224
    %v227 = vrot.slane %v226, 4
    %v228 = vmax.f32 %v226, %v227
    %v229 = vrot.slane %v228, 2
    %v230 = vmax.f32 %v228, %v229
    %v231 = vrot.slane %v230, 1
    %v232 = vmax.f32 %v230, %v231
    %vm233 = vcmp.eq.f32.partialorder %v226, %v232
    %v234 = vsel %vm233, %v39, 8
    %v235 = vrot.slane %v234, 4
    %vm236 = vcmp.lt.s32.totalorder %v234, %v235
    %v237 = vsel %vm236, %v234, %v235
    %v238 = vrot.slane %v237, 2
    %vm239 = vcmp.lt.s32.totalorder %v237, %v238
    %v240 = vsel %vm239, %v237, %v238
    %v241 = vrot.slane %v240, 1
    %vm242 = vcmp.lt.s32.totalorder %v240, %v241
    %v243 = vsel %vm242, %v240, %v241
    %s244 = scalar_lea.vmem [#allocation6], %s220
    %v245 = vld [vmem:[%s244] sm:$0x1]
    %v246 = vadd.f32 %v232, %v245
    %v247 = vlaneseq
    %v248 = vshrl.u32 %v247, 7
    %v249 = vsub.s32 0, %v248
    %v250 = vrot.slane %v246, %v249
    %v251 = vsel %vm42, %v250, -3e+38
    %252 = vmax.xlane.f32.xlu0 %v251
    %v253 = vpop.xlane.xlu0 %252
    %s254 = sadd.s32 %s52, %s220
    %p255 = scmp.lt.s32.totalorder %s254, 8
    %s256 = scalar_select %p255, 1, 0
    %v257 = vstv %s256
    %vm258 = vcmp.eq.s32.totalorder %v257, 1
    %v259 = vsel %vm258, %v253, %v217
    %vm260 = vcmp.eq.s32.totalorder %v39, 4
    %v261 = vsel %vm260, %v243, %v219
    %s262 = sadd.s32 0, 5
    %264 = vset.pattern.permute.xlu0 0
    %265 = vperm.xlu0 %264, %v259
    %v266 = vpop.permute.xlu0 %265
    %v268 = vadd.f32 %v51, %v266
    %v269 = vrot.slane %v268, 4
    %v270 = vmax.f32 %v268, %v269
    %v271 = vrot.slane %v270, 2
    %v272 = vmax.f32 %v270, %v271
    %v273 = vrot.slane %v272, 1
    %v274 = vmax.f32 %v272, %v273
    %vm275 = vcmp.eq.f32.partialorder %v268, %v274
    %v276 = vsel %vm275, %v39, 8
    %v277 = vrot.slane %v276, 4
    %vm278 = vcmp.lt.s32.totalorder %v276, %v277
    %v279 = vsel %vm278, %v276, %v277
    %v280 = vrot.slane %v279, 2
    %vm281 = vcmp.lt.s32.totalorder %v279, %v280
    %v282 = vsel %vm281, %v279, %v280
    %v283 = vrot.slane %v282, 1
    %vm284 = vcmp.lt.s32.totalorder %v282, %v283
    %v285 = vsel %vm284, %v282, %v283
    %s286 = scalar_lea.vmem [#allocation6], %s262
    %v287 = vld [vmem:[%s286] sm:$0x1]
    %v288 = vadd.f32 %v274, %v287
    %v289 = vlaneseq
    %v290 = vshrl.u32 %v289, 7
    %v291 = vsub.s32 0, %v290
    %v292 = vrot.slane %v288, %v291
    %v293 = vsel %vm42, %v292, -3e+38
    %294 = vmax.xlane.f32.xlu0 %v293
    %v295 = vpop.xlane.xlu0 %294
    %s296 = sadd.s32 %s52, %s262
    %p297 = scmp.lt.s32.totalorder %s296, 8
    %s298 = scalar_select %p297, 1, 0
    %v299 = vstv %s298
    %vm300 = vcmp.eq.s32.totalorder %v299, 1
    %v301 = vsel %vm300, %v295, %v259
    %vm302 = vcmp.eq.s32.totalorder %v39, 5
    %v303 = vsel %vm302, %v285, %v261
    %s304 = sadd.s32 0, 6
    %306 = vset.pattern.permute.xlu0 0
    %307 = vperm.xlu0 %306, %v301
    %v308 = vpop.permute.xlu0 %307
    %v310 = vadd.f32 %v51, %v308
    %v311 = vrot.slane %v310, 4
    %v312 = vmax.f32 %v310, %v311
    %v313 = vrot.slane %v312, 2
    %v314 = vmax.f32 %v312, %v313
    %v315 = vrot.slane %v314, 1
    %v316 = vmax.f32 %v314, %v315
    %vm317 = vcmp.eq.f32.partialorder %v310, %v316
    %v318 = vsel %vm317, %v39, 8
    %v319 = vrot.slane %v318, 4
    %vm320 = vcmp.lt.s32.totalorder %v318, %v319
    %v321 = vsel %vm320, %v318, %v319
    %v322 = vrot.slane %v321, 2
    %vm323 = vcmp.lt.s32.totalorder %v321, %v322
    %v324 = vsel %vm323, %v321, %v322
    %v325 = vrot.slane %v324, 1
    %vm326 = vcmp.lt.s32.totalorder %v324, %v325
    %v327 = vsel %vm326, %v324, %v325
    %s328 = scalar_lea.vmem [#allocation6], %s304
    %v329 = vld [vmem:[%s328] sm:$0x1]
    %v330 = vadd.f32 %v316, %v329
    %v331 = vlaneseq
    %v332 = vshrl.u32 %v331, 7
    %v333 = vsub.s32 0, %v332
    %v334 = vrot.slane %v330, %v333
    %v335 = vsel %vm42, %v334, -3e+38
    %336 = vmax.xlane.f32.xlu0 %v335
    %v337 = vpop.xlane.xlu0 %336
    %s338 = sadd.s32 %s52, %s304
    %p339 = scmp.lt.s32.totalorder %s338, 8
    %s340 = scalar_select %p339, 1, 0
    %v341 = vstv %s340
    %vm342 = vcmp.eq.s32.totalorder %v341, 1
    %v343 = vsel %vm342, %v337, %v301
    %vm344 = vcmp.eq.s32.totalorder %v39, 6
    %v345 = vsel %vm344, %v327, %v303
    %s346 = sadd.s32 0, 7
    %348 = vset.pattern.permute.xlu0 0
    %349 = vperm.xlu0 %348, %v343
    %v350 = vpop.permute.xlu0 %349
    %v352 = vadd.f32 %v51, %v350
    %v353 = vrot.slane %v352, 4
    %v354 = vmax.f32 %v352, %v353
    %v355 = vrot.slane %v354, 2
    %v356 = vmax.f32 %v354, %v355
    %v357 = vrot.slane %v356, 1
    %v358 = vmax.f32 %v356, %v357
    %vm359 = vcmp.eq.f32.partialorder %v352, %v358
    %v360 = vsel %vm359, %v39, 8
    %v361 = vrot.slane %v360, 4
    %vm362 = vcmp.lt.s32.totalorder %v360, %v361
    %v363 = vsel %vm362, %v360, %v361
    %v364 = vrot.slane %v363, 2
    %vm365 = vcmp.lt.s32.totalorder %v363, %v364
    %v366 = vsel %vm365, %v363, %v364
    %v367 = vrot.slane %v366, 1
    %vm368 = vcmp.lt.s32.totalorder %v366, %v367
    %v369 = vsel %vm368, %v366, %v367
    %s370 = scalar_lea.vmem [#allocation6], %s346
    %v371 = vld [vmem:[%s370] sm:$0x1]
    %v372 = vadd.f32 %v358, %v371
    %v373 = vlaneseq
    %v374 = vshrl.u32 %v373, 7
    %v375 = vsub.s32 0, %v374
    %v376 = vrot.slane %v372, %v375
    %v377 = vsel %vm42, %v376, -3e+38
    %378 = vmax.xlane.f32.xlu0 %v377
    %v379 = vpop.xlane.xlu0 %378
    %s380 = sadd.s32 %s52, %s346
    %p381 = scmp.lt.s32.totalorder %s380, 8
    %s382 = scalar_select %p381, 1, 0
    %v383 = vstv %s382
    %vm384 = vcmp.eq.s32.totalorder %v383, 1
    %v385 = vsel %vm384, %v379, %v343
    %vm386 = vcmp.eq.s32.totalorder %v39, 7
    %v387 = vsel %vm386, %v369, %v345
    %388 = vst [vmem:[#allocation8] sm:$0xff] %v387
    %vm389 = vcmask 7168
    %390 = vst.msk [vmem:[#allocation2] sm:$0xff] %vm389, %v385
    %391 = vst.msk [vmem:[%s3] sm:$0xff] %vm389, %v385
    // Predicated region
    $region22: #{tpu_custom_call.1} parent=1 // pred_check
      _
    $region23: #{tpu_custom_call.1} parent=1 // pred_check_branch
      %393 = sbr.rel (0) target = $region25
    $region24: #{tpu_custom_call.1} parent=1 // pred_region
      %s395 = ssub.s32 128, 128
      %396 = vsyncadd [#allocation5], %s395
      %s398 = sshll.u32 [#allocation8], 4
      %s399 = int_to_ptr.vmem [resolvable:$true] %s398
      %401 = dma.vmem_to_hbm [thread:$0]  %s399, 128, %s2, [#allocation5]
    $region25: #{tpu_custom_call.1} parent=1 // pred_fallthru
      _
    // Predicated region
    $region26: #{tpu_custom_call.1} parent=1 // pred_check
      _
    $region27: #{tpu_custom_call.1} parent=1 // pred_check_branch
      %403 = sbr.rel (0) target = $region29
    $region28: #{tpu_custom_call.1} parent=1 // pred_region
      _
    $region29: #{tpu_custom_call.1} parent=1 // pred_fallthru
      _
    // Predicated region
    $region30: #{tpu_custom_call.1} parent=1 // pred_check
      _
    $region31: #{tpu_custom_call.1} parent=1 // pred_check_branch
      %405 = sbr.rel (0) target = $region33
    $region32: #{tpu_custom_call.1} parent=1 // pred_region
      %406 = dma.done [#allocation5], 128
    $region33: #{tpu_custom_call.1} parent=1 // pred_fallthru
      _
    // Predicated region
    $region34: #{tpu_custom_call.1} parent=1 // pred_check
      _
    $region35: #{tpu_custom_call.1} parent=1 // pred_check_branch
      %408 = sbr.rel (0) target = $region37
    $region36: #{tpu_custom_call.1} parent=1 // pred_region
      _
    $region37: #{tpu_custom_call.1} parent=1 // pred_fallthru
      _
    %409 = vsyncpa [#allocation4], 1
    %410 = vsyncpa [#allocation7], 1
    %411 = vsyncpa [#allocation5], 1

</llo_original>
